<compile_context>
chip_gen: v7x
topology: tpu7x:2x2x1
jax: 0.10.0
libtpu: 0.0.40
codegen_flags: <defaults>
</compile_context>

<pallas_src>
import jax
import jax.numpy as jnp
from jax.experimental import pallas as pl
from jax.experimental.pallas import tpu as pltpu

_ROW_ALIGN = 32            # sublane-tile alignment covering f32(8)/bf16(16)/int8(32) packing
_WIDTHS = (1024, 512, 256, 128)


def _round_up(x, m):
    return (x + m - 1) // m * m


def _target_block_bytes():
    """Per-generation block size: 4 MiB on v6e/v7x, 2 MiB elsewhere (v5e-safe)."""
    try:
        kind = jax.devices()[0].device_kind.lower()
    except Exception:
        kind = ""
    if "v6" in kind or "v7" in kind:
        return 4 << 20
    return 2 << 20


def _scale_kernel(scale_ref, x_ref, o_ref):
    # One VPU multiply per vreg.  Compute in f32 so low-precision activations are
    # not scaled by a rounded low-precision constant, then cast back.
    s = scale_ref[0]
    o_ref[...] = (x_ref[...].astype(jnp.float32) * s).astype(o_ref.dtype)


def _pallas_scale(y, scale):
    """Apply y * scale with a Pallas TPU kernel, preserving shape & dtype."""
    orig_shape = y.shape
    orig_dtype = y.dtype
    n = y.size
    if n == 0:
        return y

    if not jnp.issubdtype(orig_dtype, jnp.floating):
        # f32 roundtrip in the kernel would truncate integers toward zero; keep
        # plain elementwise semantics for non-float dtypes.
        return (y * scale).astype(orig_dtype)

    width = next((w for w in _WIDTHS if n % w == 0), None)
    if width is None:
        # Ragged element count (< full 128-lane multiple).  A plain XLA multiply
        # is already HBM-roofline (1 read + 1 write); the old pad+slice path
        # cost 3x the traffic.
        # TODO(synk): in-kernel masked pltpu.store tail path if this must stay in Pallas.
        return (y.astype(jnp.float32) * jnp.float32(scale)).astype(orig_dtype)

    rows = n // width
    x2d = y.reshape(rows, width)              # free, row-major, lane-dense slab
    itemsize = jnp.dtype(orig_dtype).itemsize

    # Biggest block that fits comfortably in scoped VMEM on this generation.
    max_rows = max(_ROW_ALIGN,
                   (_target_block_bytes() // (width * itemsize)) // _ROW_ALIGN * _ROW_ALIGN)
    # Guarantee >=2 grid steps when there is enough work, so v7x's two
    # TensorCores both get a share of the "parallel" grid axis.
    half_rows = _round_up(pl.cdiv(rows, 2), _ROW_ALIGN)
    tile_rows = min(max_rows, half_rows)
    if tile_rows >= rows:
        tile_rows = rows                      # full-extent block is always legal
    grid = (pl.cdiv(rows, tile_rows),)

    scale_arr = jnp.asarray([scale], jnp.float32)

    out2d = pl.pallas_call(
        _scale_kernel,
        out_shape=jax.ShapeDtypeStruct((rows, width), orig_dtype),
        grid_spec=pltpu.PrefetchScalarGridSpec(
            num_scalar_prefetch=1,            # scale lives in SMEM; no recompile per value
            grid=grid,
            in_specs=[pl.BlockSpec((tile_rows, width), lambda i, s_ref: (i, 0))],
            out_specs=pl.BlockSpec((tile_rows, width), lambda i, s_ref: (i, 0)),
        ),
        compiler_params=pltpu.CompilerParams(
            dimension_semantics=("parallel",),       # megacore sharding on v7x
            vmem_limit_bytes=32 << 20,               # covers 4x block double-buffered footprint
        ),
        cost_estimate=pl.CostEstimate(
            flops=n, transcendentals=0, bytes_accessed=2 * n * itemsize),
    )(scale_arr, x2d)

    return out2d.reshape(orig_shape)


class Scale:
    """JAX/Pallas port of conformer.Scale: forward(x, **kwargs) = fn(x, **kwargs) * scale.

    If `fn` exposes `fold_scale(scale)` (i.e. it can absorb the constant into its
    own epilogue, such as the last matmul's weights/bias), Scale uses that fused
    form — zero extra HBM traffic.  Otherwise it falls back to the Pallas kernel.
    """

    def __init__(self, scale, fn):
        self.scale = scale
        self.fn = fn
        self._fused_fn = fn.fold_scale(scale) if hasattr(fn, "fold_scale") else None

    def __call__(self, x, **kwargs):
        if self._fused_fn is not None:
            return self._fused_fn(x, **kwargs)
        y = self.fn(x, **kwargs)
        return _pallas_scale(y, self.scale)


class FeedForward:
    """Deterministic conformer-style FeedForward: Linear -> SiLU -> Linear."""

    def __init__(self, key, dim, mult=2):
        k1, k2 = jax.random.split(key)
        self.w1 = jax.random.normal(k1, (dim, dim * mult), jnp.float32) * (1.0 / jnp.sqrt(dim))
        self.b1 = jnp.zeros((dim * mult,), jnp.float32)
        self.w2 = jax.random.normal(k2, (dim * mult, dim), jnp.float32) * (1.0 / jnp.sqrt(dim * mult))
        self.b2 = jnp.zeros((dim,), jnp.float32)

    def __call__(self, x):
        h = jax.nn.silu(x @ self.w1 + self.b1)
        return h @ self.w2 + self.b2

    def fold_scale(self, scale):
        """Fold `scale` into the last Linear's weights/bias (free at runtime)."""
        w1, b1 = self.w1, self.b1
        w2 = self.w2 * scale
        b2 = self.b2 * scale

        def fused(x):
            h = jax.nn.silu(x @ w1 + b1)
            return h @ w2 + b2

        return fused


if __name__ == "__main__":
    key = jax.random.PRNGKey(0)
    k_x, k_ff, k_z, k_big = jax.random.split(key, 4)

    # Main example: Scale wrapping a FeedForward, (batch=2, seq=8, dim=32)
    batch, seq, dim = 2, 8, 32
    x = jax.random.normal(k_x, (batch, seq, dim), jnp.float32)
    ff = FeedForward(k_ff, dim)
    ref = ff(x) * 0.5

    # 1) Generic fn (no fold hook) -> Pallas kernel path.
    generic = Scale(0.5, lambda t: ff(t))
    out_kernel = jax.block_until_ready(generic(x))
    assert out_kernel.shape == ref.shape and out_kernel.dtype == ref.dtype
    assert jnp.allclose(out_kernel, ref, atol=1e-5, rtol=1e-5), "mismatch (Pallas path)"

    # 2) Foldable fn -> scale absorbed into the last matmul's epilogue (no extra pass).
    fused = Scale(0.5, ff)
    out_fused = jax.block_until_ready(fused(x))
    assert jnp.allclose(out_fused, ref, atol=1e-5, rtol=1e-5), "mismatch (fused path)"

    # 3) Multi-block grid check (exercises >=2 grid steps / megacore sharding).
    big = jax.random.normal(k_big, (256, 256), jnp.float32)
    out_big = jax.block_until_ready(_pallas_scale(big, -1.5))
    assert jnp.allclose(out_big, big * -1.5, atol=1e-6, rtol=1e-6), "mismatch (multi-block)"

    # 4) Ragged element count -> XLA-roofline fallback (no pad/slice extra traffic).
    z = jax.random.normal(k_z, (3, 5, 24), jnp.float32)     # 360 elems, not a 128 multiple
    out_z = jax.block_until_ready(_pallas_scale(z, 1.25))
    assert jnp.allclose(out_z, z * 1.25, atol=1e-6, rtol=1e-6), "mismatch (ragged path)"

    print("KERNEL_OK")
</pallas_src>

<mosaic_0001>
module attributes {stable_mosaic.version = 11 : i64} {
  func.func @_scale_kernel(%arg0: i32, %arg1: memref<1xf32, #tpu.memory_space<smem>>, %arg2: memref<1x512xf32, #tpu.memory_space<vmem>>, %arg3: memref<1x512xf32, #tpu.memory_space<vmem>>) attributes {dimension_semantics = [#tpu.dimension_semantics<parallel>], iteration_bounds = array<i64: 1>, scalar_prefetch = 1 : i64, scratch_operands = 0 : i64, tpu.core_type = #tpu.core_type<tc>, window_params = [{transform_indices = @transform_0, window_bounds = array<i64: 1, 512>}, {transform_indices = @transform_1, window_bounds = array<i64: 1, 512>}]} {
    %c0 = arith.constant 0 : index
    %0 = memref.load %arg1[%c0] : memref<1xf32, #tpu.memory_space<smem>>
    %c0_0 = arith.constant 0 : index
    %c0_1 = arith.constant 0 : index
    %1 = vector.load %arg2[%c0_0, %c0_1] : memref<1x512xf32, #tpu.memory_space<vmem>>, vector<1x512xf32>
    %2 = vector.broadcast %0 : f32 to vector<1x512xf32>
    %3 = arith.mulf %1, %2 : vector<1x512xf32>
    %c0_2 = arith.constant 0 : index
    %c0_3 = arith.constant 0 : index
    %4 = vector.load %arg3[%c0_2, %c0_3] : memref<1x512xf32, #tpu.memory_space<vmem>>, vector<1x512xf32>
    tpu.vector_store %arg3[%c0_2, %c0_3], %3 {strides = array<i32>} : memref<1x512xf32, #tpu.memory_space<vmem>>, vector<1x512xf32>,
    return
  }
  func.func @transform_0(%arg0: i32, %arg1: memref<1xf32, #tpu.memory_space<smem>>) -> (i32, i32) {
    %c0_i32 = arith.constant 0 : i32
    %c0_i32_0 = arith.constant 0 : i32
    return %arg0, %c0_i32 : i32, i32
  }
  func.func @transform_1(%arg0: i32, %arg1: memref<1xf32, #tpu.memory_space<smem>>) -> (i32, i32) {
    %c0_i32 = arith.constant 0 : i32
    %c0_i32_0 = arith.constant 0 : i32
    return %arg0, %c0_i32 : i32, i32
  }
}

</mosaic_0001>

<llo_original>
// kernel: tpu_custom_call.1
$region0: #{tpu_custom_call.1}
  #allocation0 [shape = 'u32[]', space=smem, size = 0x4, offset = 0x4, fixed_abs, tag = 'smem constant byte address 0x4 - core index']
  #allocation1 [shape = 'u32[144,128]{1,0:T(1,128)}', space=vmem, size = 0x12000, scoped, tag = 'internal scratch']
  #allocation2 [shape = 's32[1]{0}', space=sflag, size = 0x4, scoped, tag = 'scoped memory for tpu_custom_call.1']
  #allocation3 [shape = 'f32[1]{0:T(128)S(6)}', space=smem, size = 0x200, scoped, tag = 'prefetched SMEM operand 0']
  %s0 = inlined_call_operand.<no memory space> [shape: f32[1], index: 0, kind: input, shape index: {}]
  %s1 = inlined_call_operand.hbm [shape: f32[1,512], index: 1, kind: input, shape index: {}]
  %s2 = inlined_call_operand.hbm [shape: f32[1,512], index: 2, kind: output, shape index: {}]
  %s3 = sld [smem:[#allocation0]]
  $region18: #{tpu_custom_call.1} parent=0
    _
  %s5 = ssub.s32 1, %s3
  %s6 = scalar_select 0, %s5, %s3
  %7 = sst [smem:[#allocation3]] %s0
  $region1: #{tpu_custom_call.1} parent=0
    #allocation4 [shape = 'u8[2048]{0}', space=vmem, size = 0x800, scoped, tag = 'input window, operand 1, single buffered']
    #allocation5 [shape = 's32[1]{0}', space=sflag, size = 0x4, scoped, tag = 'scoped memory for tpu_custom_call.1']
    #allocation6 [shape = 's32[1]{0}', space=sflag, size = 0x4, scoped, tag = 'scoped memory for tpu_custom_call.1']
    #allocation7 [shape = 'u8[2048]{0}', space=vmem, size = 0x800, scoped, tag = 'output window, operand 0, single buffered']
    %8 = vsyncpa [#allocation5], 0
    %9 = vsyncpa [#allocation6], 0
    // Predicated region
    $region2: #{tpu_custom_call.1} parent=1 // pred_check
      _
    $region3: #{tpu_custom_call.1} parent=1 // pred_check_branch
      %11 = sbr.rel (0) target = $region5
    $region4: #{tpu_custom_call.1} parent=1 // pred_region
      %s13 = ssub.s32 64, 64
      %14 = vsyncadd [#allocation5], %s13
      %s16 = sshll.u32 [#allocation4], 4
      %s17 = int_to_ptr.vmem [resolvable:$true] %s16
      %19 = dma.hbm_to_vmem [thread:$0]  %s1, 64, %s17, [#allocation5]
    $region5: #{tpu_custom_call.1} parent=1 // pred_fallthru
      _
    // Predicated region
    $region6: #{tpu_custom_call.1} parent=1 // pred_check
      _
    $region7: #{tpu_custom_call.1} parent=1 // pred_check_branch
      %21 = sbr.rel (0) target = $region9
    $region8: #{tpu_custom_call.1} parent=1 // pred_region
      %22 = dma.done [#allocation5], 64
    $region9: #{tpu_custom_call.1} parent=1 // pred_fallthru
      _
    %s23 = sld [smem:[#allocation3]]
    %v24 = vld [vmem:[#allocation4] sm:$0xf]
    %v25 = vstv %s23
    %v26 = vmul.f32 %v24, %v25
    %v27 = vlaneseq
    %vm28 = vcmp.ge.s32.totalorder %v27, 0
    %vm29 = vcmp.lt.s32.totalorder %v27, 512
    %vm30 = vmand %vm28, %vm29
    %31 = vst.msk [vmem:[#allocation7] sm:$0xf] %vm30, %v26
    // Predicated region
    $region10: #{tpu_custom_call.1} parent=1 // pred_check
      _
    $region11: #{tpu_custom_call.1} parent=1 // pred_check_branch
      %33 = sbr.rel (0) target = $region13
    $region12: #{tpu_custom_call.1} parent=1 // pred_region
      %s35 = ssub.s32 64, 64
      %36 = vsyncadd [#allocation6], %s35
      %s38 = sshll.u32 [#allocation7], 4
      %s39 = int_to_ptr.vmem [resolvable:$true] %s38
      %41 = dma.vmem_to_hbm [thread:$0]  %s39, 64, %s2, [#allocation6]
    $region13: #{tpu_custom_call.1} parent=1 // pred_fallthru
      _
    // Predicated region
    $region14: #{tpu_custom_call.1} parent=1 // pred_check
      _
    $region15: #{tpu_custom_call.1} parent=1 // pred_check_branch
      %43 = sbr.rel (0) target = $region17
    $region16: #{tpu_custom_call.1} parent=1 // pred_region
      %44 = dma.done [#allocation6], 64
    $region17: #{tpu_custom_call.1} parent=1 // pred_fallthru
      _
    %45 = vsyncpa [#allocation5], 1
    %46 = vsyncpa [#allocation6], 1

</llo_original>
